<compile_context>
chip_gen: v5e
topology: v5e:2x2
jax: 0.10.0
libtpu: 0.0.40
codegen_flags: <defaults>
</compile_context>

<pallas_src>
import functools

import jax
import jax.numpy as jnp
from jax import lax
from jax.experimental import pallas as pl
from jax.experimental.pallas import tpu as pltpu

_LANE = 128
_SUBLANE = 8
_SMOOTH = 1e-05
# sigmoid(-30) == 0 exactly in f32 via the tanh form (tanh(-15) rounds to -1),
# so masked positions contribute exactly nothing to any of the three sums.
_NEG_MASK = -30.0


def _ce_dice_partial_kernel(x_ref, t_ref, out_ref, *, d_valid, tile_r, need_mask):
    """Partial dice sums for one (sample, row-chunk) tile.

    x_ref, t_ref : (1, tile_r, 128) VMEM tiles of logits / targets
    out_ref      : (1, 1, 3) SMEM slot: [intersection, input_sum, target_sum]
    """
    x = x_ref[0].astype(jnp.float32)
    t = t_ref[0].astype(jnp.float32)

    if need_mask:
        # The last chunk overruns the valid data (lane padding and/or rows
        # past ceil(D/128)); those block contents are undefined, so mask
        # BEFORE the tanh: x -> -30 (sigmoid == 0), t -> 0, which makes the
        # invalid positions contribute exactly nothing to all three sums.
        base = pl.program_id(1) * (tile_r * _LANE)
        row_idx = lax.broadcasted_iota(jnp.int32, (tile_r, _LANE), 0)
        lane_idx = lax.broadcasted_iota(jnp.int32, (tile_r, _LANE), 1)
        valid = (base + row_idx * _LANE + lane_idx) < d_valid
        x = jnp.where(valid, x, _NEG_MASK)
        t = jnp.where(valid, t, 0.0)

    # sigmoid(x) == 0.5 * (tanh(0.5 * x) + 1): a single EUP push per element
    # (cheaper than exp + divide), the rest is cheap VPU mul/add.
    s = 0.5 * (jnp.tanh(0.5 * x) + 1.0)

    # Two-stage reduction: fold the tile's sublane groups with plain vreg adds
    # (pure VPU), then reduce a single (8, 128) slab per quantity (XLU) — the
    # XLU never becomes the binding slot even with large tiles.
    groups = tile_r // _SUBLANE

    def tile_sum(v):
        return jnp.sum(jnp.sum(v.reshape(groups, _SUBLANE, _LANE), axis=0))

    out_ref[0, 0, 0] = tile_sum(s * t)   # intersection
    out_ref[0, 0, 1] = tile_sum(s)       # sum(sigmoid(x))
    out_ref[0, 0, 2] = tile_sum(t)       # sum(target)


def ce_dice_loss(logits, target, *, tile_rows=512, cast_target_bf16=True):
    """Pallas implementation of CEDiceLoss.forward (sigmoid + soft dice).

    tile_rows        : rows of 128 lanes streamed per grid step. Default 512
                       -> 256 KiB f32 logits per block; double-buffered inputs
                       stay well under every generation's scoped VMEM limit.
    cast_target_bf16 : stream the target as bf16 (25% fewer HBM bytes with f32
                       logits). Exact for binary 0/1 masks (the dice use case);
                       set False for soft (non-binary) float targets.
    """
    num = logits.shape[0]
    x2d = logits.reshape(num, -1)
    t2d = target.reshape(num, -1)
    d = x2d.shape[1]

    if cast_target_bf16 and t2d.dtype == jnp.float32:
        t2d = t2d.astype(jnp.bfloat16)

    # Geometry: rows of 128 lanes per sample. Only a <128-element lane pad is
    # ever materialized (none when D % 128 == 0); row-chunk overrun beyond
    # `rows` is masked inside the kernel, so the reduction axis never forces a
    # full extra HBM padding pass.
    rows = -(-d // _LANE)
    d128 = rows * _LANE
    if d128 != d:
        # Pad values are irrelevant: the in-kernel mask covers them.
        x2d = jnp.pad(x2d, ((0, 0), (0, d128 - d)))
        t2d = jnp.pad(t2d, ((0, 0), (0, d128 - d)))

    rows8 = -(-rows // _SUBLANE) * _SUBLANE
    tile_r = max(_SUBLANE, min(int(tile_rows), rows8))
    tile_r = (tile_r // _SUBLANE) * _SUBLANE
    n_chunks = -(-rows // tile_r)
    need_mask = (n_chunks * tile_r * _LANE) != d

    x3 = x2d.reshape(num, rows, _LANE)
    t3 = t2d.reshape(num, rows, _LANE)

    kernel = functools.partial(
        _ce_dice_partial_kernel, d_valid=d, tile_r=tile_r, need_mask=need_mask
    )

    partials = pl.pallas_call(
        kernel,
        out_shape=jax.ShapeDtypeStruct((num, n_chunks, 3), jnp.float32),
        grid_spec=pltpu.PrefetchScalarGridSpec(
            num_scalar_prefetch=0,
            grid=(num, n_chunks),
            in_specs=[
                pl.BlockSpec((1, tile_r, _LANE), lambda n, k: (n, k, 0)),
                pl.BlockSpec((1, tile_r, _LANE), lambda n, k: (n, k, 0)),
            ],
            out_specs=pl.BlockSpec(
                (1, 1, 3), lambda n, k: (n, k, 0), memory_space=pltpu.SMEM
            ),
        ),
        compiler_params=pltpu.CompilerParams(
            dimension_semantics=("parallel", "parallel"),
        ),
    )(x3, t3)

    # Tiny per-sample reduction + dice formula in plain JAX.
    sums = partials.sum(axis=1)  # (num, 3)
    inter = sums[:, 0]
    in_sum = sums[:, 1]
    tg_sum = sums[:, 2]
    dice = (2.0 * inter + _SMOOTH) / (in_sum + tg_sum + _SMOOTH)
    return 1.0 - jnp.sum(dice) / num


def _reference_loss(logits, target):
    smooth = 1e-05
    num = logits.shape[0]
    x = jax.nn.sigmoid(logits.astype(jnp.float32)).reshape(num, -1)
    t = target.astype(jnp.float32).reshape(num, -1)
    inter = (x * t).sum(1)
    dice = (2.0 * inter + smooth) / (x.sum(1) + t.sum(1) + smooth)
    return 1.0 - dice.sum() / num


if __name__ == "__main__":
    key = jax.random.PRNGKey(0)
    k = jax.random.split(key, 6)

    # Shape implied by the module: NCHW = (2, 4, 16, 16) -> D = 1024.
    N, C, H, W = 2, 4, 16, 16
    logits = jax.random.normal(k[0], (N, C, H, W), dtype=jnp.float32)
    target = (jax.random.uniform(k[1], (N, C, H, W)) > 0.5).astype(jnp.float32)
    loss = ce_dice_loss(logits, target)
    jax.block_until_ready(loss)
    ref = _reference_loss(logits, target)
    assert jnp.allclose(loss, ref, rtol=1e-5, atol=1e-5), (loss, ref)

    # rows (=15) not a multiple of the 8-row tile: exercises the OOB-row mask.
    logits2 = jax.random.normal(k[2], (2, 4, 20, 24), dtype=jnp.float32)  # D = 1920
    target2 = (jax.random.uniform(k[3], (2, 4, 20, 24)) > 0.5).astype(jnp.float32)
    loss2 = ce_dice_loss(logits2, target2)
    jax.block_until_ready(loss2)
    ref2 = _reference_loss(logits2, target2)
    assert jnp.allclose(loss2, ref2, rtol=1e-5, atol=1e-5), (loss2, ref2)

    # D (=300) not a multiple of 128: exercises the minimal lane pad + mask.
    logits3 = jax.random.normal(k[4], (3, 3, 10, 10), dtype=jnp.float32)
    target3 = (jax.random.uniform(k[5], (3, 3, 10, 10)) > 0.5).astype(jnp.float32)
    loss3 = ce_dice_loss(logits3, target3)
    jax.block_until_ready(loss3)
    ref3 = _reference_loss(logits3, target3)
    assert jnp.allclose(loss3, ref3, rtol=1e-5, atol=1e-5), (loss3, ref3)

    print("KERNEL_OK")
</pallas_src>

<mosaic_0001>
module attributes {stable_mosaic.version = 11 : i64} {
  func.func @_ce_dice_partial_kernel(%arg0: i32, %arg1: i32, %arg2: memref<1x8x128xf32, #tpu.memory_space<vmem>>, %arg3: memref<1x8x128xbf16, #tpu.memory_space<vmem>>, %arg4: memref<1x1x3xf32, #tpu.memory_space<smem>>) attributes {dimension_semantics = [#tpu.dimension_semantics<parallel>, #tpu.dimension_semantics<parallel>], iteration_bounds = array<i64: 2, 1>, scalar_prefetch = 0 : i64, scratch_operands = 0 : i64, tpu.core_type = #tpu.core_type<tc>, window_params = [{transform_indices = @transform_0, window_bounds = array<i64: 1, 8, 128>}, {transform_indices = @transform_1, window_bounds = array<i64: 1, 8, 128>}, {transform_indices = @transform_2, window_bounds = array<i64: 1, 1, 3>}]} {
    %c0 = arith.constant 0 : index
    %c0_0 = arith.constant 0 : index
    %c0_1 = arith.constant 0 : index
    %0 = vector.load %arg2[%c0, %c0_0, %c0_1] : memref<1x8x128xf32, #tpu.memory_space<vmem>>, vector<1x8x128xf32>
    %1 = vector.shape_cast %0 : vector<1x8x128xf32> to vector<8x128xf32>
    %c0_2 = arith.constant 0 : index
    %c0_3 = arith.constant 0 : index
    %c0_4 = arith.constant 0 : index
    %2 = vector.load %arg3[%c0_2, %c0_3, %c0_4] : memref<1x8x128xbf16, #tpu.memory_space<vmem>>, vector<1x8x128xbf16>
    %3 = vector.shape_cast %2 : vector<1x8x128xbf16> to vector<8x128xbf16>
    %4 = arith.extf %3 : vector<8x128xbf16> to vector<8x128xf32>
    %cst = arith.constant 5.000000e-01 : f32
    %5 = vector.broadcast %cst : f32 to vector<8x128xf32>
    %6 = arith.mulf %5, %1 : vector<8x128xf32>
    %7 = math.tanh %6 : vector<8x128xf32>
    %cst_5 = arith.constant 1.000000e+00 : f32
    %8 = vector.broadcast %cst_5 : f32 to vector<8x128xf32>
    %9 = arith.addf %7, %8 : vector<8x128xf32>
    %cst_6 = arith.constant 5.000000e-01 : f32
    %10 = vector.broadcast %cst_6 : f32 to vector<8x128xf32>
    %11 = arith.mulf %10, %9 : vector<8x128xf32>
    %12 = arith.mulf %11, %4 : vector<8x128xf32>
    %13 = vector.shape_cast %12 : vector<8x128xf32> to vector<1x8x128xf32>
    %cst_7 = arith.constant dense<0.000000e+00> : vector<8x128xf32>
    %14 = vector.multi_reduction <add>, %13, %cst_7 [0] : vector<1x8x128xf32> to vector<8x128xf32>
    %15 = vector.shape_cast %14 : vector<8x128xf32> to vector<1x8x128xf32>
    %cst_8 = arith.constant dense<0.000000e+00> : vector<1xf32>
    %16 = vector.multi_reduction <add>, %15, %cst_8 [1, 2] : vector<1x8x128xf32> to vector<1xf32>
    %17 = vector.shape_cast %16 : vector<1xf32> to vector<1x1x1xf32>
    %18 = vector.extract %17[0, 0, 0] : f32 from vector<1x1x1xf32>
    %c0_9 = arith.constant 0 : index
    %c0_10 = arith.constant 0 : index
    %c0_11 = arith.constant 0 : index
    %19 = memref.load %arg4[%c0_9, %c0_10, %c0_11] : memref<1x1x3xf32, #tpu.memory_space<smem>>
    memref.store %18, %arg4[%c0_9, %c0_10, %c0_11] : memref<1x1x3xf32, #tpu.memory_space<smem>>
    %20 = vector.shape_cast %11 : vector<8x128xf32> to vector<1x8x128xf32>
    %cst_12 = arith.constant dense<0.000000e+00> : vector<8x128xf32>
    %21 = vector.multi_reduction <add>, %20, %cst_12 [0] : vector<1x8x128xf32> to vector<8x128xf32>
    %22 = vector.shape_cast %21 : vector<8x128xf32> to vector<1x8x128xf32>
    %cst_13 = arith.constant dense<0.000000e+00> : vector<1xf32>
    %23 = vector.multi_reduction <add>, %22, %cst_13 [1, 2] : vector<1x8x128xf32> to vector<1xf32>
    %24 = vector.shape_cast %23 : vector<1xf32> to vector<1x1x1xf32>
    %25 = vector.extract %24[0, 0, 0] : f32 from vector<1x1x1xf32>
    %c0_14 = arith.constant 0 : index
    %c0_15 = arith.constant 0 : index
    %c1 = arith.constant 1 : index
    %26 = memref.load %arg4[%c0_14, %c0_15, %c1] : memref<1x1x3xf32, #tpu.memory_space<smem>>
    memref.store %25, %arg4[%c0_14, %c0_15, %c1] : memref<1x1x3xf32, #tpu.memory_space<smem>>
    %27 = vector.shape_cast %4 : vector<8x128xf32> to vector<1x8x128xf32>
    %cst_16 = arith.constant dense<0.000000e+00> : vector<8x128xf32>
    %28 = vector.multi_reduction <add>, %27, %cst_16 [0] : vector<1x8x128xf32> to vector<8x128xf32>
    %29 = vector.shape_cast %28 : vector<8x128xf32> to vector<1x8x128xf32>
    %cst_17 = arith.constant dense<0.000000e+00> : vector<1xf32>
    %30 = vector.multi_reduction <add>, %29, %cst_17 [1, 2] : vector<1x8x128xf32> to vector<1xf32>
    %31 = vector.shape_cast %30 : vector<1xf32> to vector<1x1x1xf32>
    %32 = vector.extract %31[0, 0, 0] : f32 from vector<1x1x1xf32>
    %c0_18 = arith.constant 0 : index
    %c0_19 = arith.constant 0 : index
    %c2 = arith.constant 2 : index
    %33 = memref.load %arg4[%c0_18, %c0_19, %c2] : memref<1x1x3xf32, #tpu.memory_space<smem>>
    memref.store %32, %arg4[%c0_18, %c0_19, %c2] : memref<1x1x3xf32, #tpu.memory_space<smem>>
    return
  }
  func.func @transform_0(%arg0: i32, %arg1: i32) -> (i32, i32, i32) {
    %c0_i32 = arith.constant 0 : i32
    %c0_i32_0 = arith.constant 0 : i32
    return %arg0, %arg1, %c0_i32 : i32, i32, i32
  }
  func.func @transform_1(%arg0: i32, %arg1: i32) -> (i32, i32, i32) {
    %c0_i32 = arith.constant 0 : i32
    %c0_i32_0 = arith.constant 0 : i32
    return %arg0, %arg1, %c0_i32 : i32, i32, i32
  }
  func.func @transform_2(%arg0: i32, %arg1: i32) -> (i32, i32, i32) {
    %c0_i32 = arith.constant 0 : i32
    %c0_i32_0 = arith.constant 0 : i32
    return %arg0, %arg1, %c0_i32 : i32, i32, i32
  }
}

</mosaic_0001>

<llo_original>
// kernel: tpu_custom_call.1
$region0: #{tpu_custom_call.1}
  #allocation0 [shape = 'u32[]', space=smem, size = 0x4, offset = 0x4, fixed_abs, tag = 'smem constant byte address 0x4 - core index']
  #allocation1 [shape = 'u32[72,128]{1,0:T(1,128)}', space=vmem, size = 0x9000, scoped, tag = 'internal scratch']
  %s0 = inlined_call_operand.hbm [shape: f32[2,8,128], index: 0, kind: input, shape index: {}]
  %s1 = inlined_call_operand.hbm [shape: bf16[2,8,128], index: 1, kind: input, shape index: {}]
  %s2 = inlined_call_operand.hbm [shape: f32[2,1,3], index: 2, kind: output, shape index: {}]
  %s3 = sld [smem:[#allocation0]]
  $region49: #{tpu_custom_call.1} parent=0
    _
  %s5 = ssub.s32 1, %s3
  %s6 = scalar_select 0, %s5, %s3
  $region1: #{tpu_custom_call.1} parent=0
    #allocation2 [shape = 'u8[8192]{0}', space=vmem, size = 0x2000, scoped, tag = 'input window, operand 0']
    #allocation3 [shape = 's32[2]{0}', space=sflag, size = 0x8, scoped, tag = 'scoped memory for tpu_custom_call.1']
    #allocation4 [shape = 's32[2]{0}', space=sflag, size = 0x8, scoped, tag = 'scoped memory for tpu_custom_call.1']
    #allocation5 [shape = 'u8[4096]{0}', space=vmem, size = 0x1000, scoped, tag = 'input window, operand 1']
    #allocation6 [shape = 's32[2]{0}', space=sflag, size = 0x8, scoped, tag = 'scoped memory for tpu_custom_call.1']
    #allocation7 [shape = 'u8[1024]{0}', space=smem, size = 0x400, scoped, tag = 'output window, operand 0']
    %7 = vsyncpa [#allocation3], 0
    %s8 = scalar_lea.sflag [#allocation3], 1
    %9 = vsyncpa %s8, 0
    %10 = vsyncpa [#allocation6], 0
    %s11 = scalar_lea.sflag [#allocation6], 1
    %12 = vsyncpa %s11, 0
    %13 = vsyncpa [#allocation4], 0
    %s14 = scalar_lea.sflag [#allocation4], 1
    %15 = vsyncpa %s14, 0
    loop: start=0, step=1, limit=4
    $region2: #{tpu_custom_call.1} parent=1 // loop_pre_header
      _
    $region3: #{tpu_custom_call.1} parent=1 // loop_header
      %s17 = sphi 0, %s21
      %p18 = scmp.ge.s32.totalorder %s17, 4
      %s24 = sphi 0, %s36
      %s25 = sphi 0, %s32
      %s26 = sphi 0, %s24
      %s27 = sphi 0, %s25
      %s28 = sphi 0, %s26
      %s29 = sphi 0, %s27
      %s41 = sphi 0, %s43
      %s44 = sphi 0, %s41
      %s45 = sphi 0, %s44
      %s61 = sphi 0, %s45
      %s69 = sphi 0, %s71
      %s72 = sphi 0, %s69
      %s73 = sphi 0, %s72
      %s89 = sphi 0, %s73
      %s97 = sphi 0, %s99
      %s100 = sphi 0, %s97
      %s101 = sphi 0, %s100
      %s117 = sphi 0, %s101
    $region4: #{tpu_custom_call.1} parent=1 // loop_header_branch
      %20 = sbr.rel (%p18) target = $region8
    $region5: #{tpu_custom_call.1} parent=1 // loop_body
      %s22 = ssub.s32 %s17, 1
      %s23 = ssub.s32 %s17, 2
      %s30 = sadd.s32 1, %s25
      %p31 = scmp.ge.s32.totalorder %s30, 1
      %s32 = scalar_select %p31, 0, %s30
      %s33 = sadd.s32 1, %s24
      %s34 = scalar_select %p31, %s33, %s24
      %p35 = scmp.ge.s32.totalorder %s34, 2
      %s36 = scalar_select %p35, 0, %s34
      %s37 = ssub.s32 %s24, %s36
      %s38 = ssub.s32 %s25, %s32
      %s39 = sor.u32 %s37, %s38
      %p40 = scmp.eq.s32.totalorder %s39, 0
      %s42 = sadd.s32 %s41, 1
      %s43 = scalar_select %p40, %s41, %s42
      %p46 = pneg %p40
      %p47 = scmp.eq.s32.totalorder %s17, 1
      %p48 = por %p46, %p47
      %p49 = scmp.ne.s32.totalorder %s41, %s44
      %p50 = scmp.eq.s32.totalorder %s17, 0
      %p51 = por %p49, %p50
      %p52 = scmp.ne.s32.totalorder %s41, %s44
      %p53 = scmp.eq.s32.totalorder %s22, 1
      %p54 = por %p52, %p53
      %p55 = scmp.ne.s32.totalorder %s44, %s45
      %p56 = scmp.eq.s32.totalorder %s22, 0
      %p57 = por %p55, %p56
      %p58 = scmp.ne.s32.totalorder %s44, %s45
      %p59 = scmp.eq.s32.totalorder %s23, 1
      %p60 = por %p58, %p59
      %p62 = scmp.ne.s32.totalorder %s45, %s61
      %p63 = scmp.eq.s32.totalorder %s23, 0
      %p64 = por %p62, %p63
      %s65 = ssub.s32 %s24, %s36
      %s66 = ssub.s32 %s25, %s32
      %s67 = sor.u32 %s65, %s66
      %p68 = scmp.eq.s32.totalorder %s67, 0
      %s70 = sadd.s32 %s69, 1
      %s71 = scalar_select %p68, %s69, %s70
      %p74 = pneg %p68
      %p75 = scmp.eq.s32.totalorder %s17, 1
      %p76 = por %p74, %p75
      %p77 = scmp.ne.s32.totalorder %s69, %s72
      %p78 = scmp.eq.s32.totalorder %s17, 0
      %p79 = por %p77, %p78
      %p80 = scmp.ne.s32.totalorder %s69, %s72
      %p81 = scmp.eq.s32.totalorder %s22, 1
      %p82 = por %p80, %p81
      %p83 = scmp.ne.s32.totalorder %s72, %s73
      %p84 = scmp.eq.s32.totalorder %s22, 0
      %p85 = por %p83, %p84
      %p86 = scmp.ne.s32.totalorder %s72, %s73
      %p87 = scmp.eq.s32.totalorder %s23, 1
      %p88 = por %p86, %p87
      %p90 = scmp.ne.s32.totalorder %s73, %s89
      %p91 = scmp.eq.s32.totalorder %s23, 0
      %p92 = por %p90, %p91
      %s93 = ssub.s32 %s24, %s36
      %s94 = ssub.s32 %s25, %s32
      %s95 = sor.u32 %s93, %s94
      %p96 = scmp.eq.s32.totalorder %s95, 0
      %s98 = sadd.s32 %s97, 1
      %s99 = scalar_select %p96, %s97, %s98
      %p102 = pneg %p96
      %p103 = scmp.eq.s32.totalorder %s17, 1
      %p104 = por %p102, %p103
      %p105 = scmp.ne.s32.totalorder %s97, %s100
      %p106 = scmp.eq.s32.totalorder %s17, 0
      %p107 = por %p105, %p106
      %p108 = scmp.ne.s32.totalorder %s97, %s100
      %p109 = scmp.eq.s32.totalorder %s22, 1
      %p110 = por %p108, %p109
      %p111 = scmp.ne.s32.totalorder %s100, %s101
      %p112 = scmp.eq.s32.totalorder %s22, 0
      %p113 = por %p111, %p112
      %p114 = scmp.ne.s32.totalorder %s100, %s101
      %p115 = scmp.eq.s32.totalorder %s23, 1
      %p116 = por %p114, %p115
      %p118 = scmp.ne.s32.totalorder %s101, %s117
      %p119 = scmp.eq.s32.totalorder %s23, 0
      %p120 = por %p118, %p119
      %p121 = scmp.le.s32.totalorder 1, %s17
      %p122 = scmp.lt.s32.totalorder %s17, 3
      %p123 = pnand %p121, %p122
      %p124 = pneg %p123
      // Predicated region
      $region9: #{tpu_custom_call.1} parent=5 // pred_check
        _
      $region10: #{tpu_custom_call.1} parent=5 // pred_check_branch
        %126 = sbr.rel (%p123) target = $region12
      $region11: #{tpu_custom_call.1} parent=5 // pred_region
        %s127 = ssub.s32 %s17, 1
      $region12: #{tpu_custom_call.1} parent=5 // pred_fallthru
        _
      %p128 = scmp.lt.s32.totalorder %s17, 2
      // Predicated region
      $region13: #{tpu_custom_call.1} parent=5 // pred_check
        %p129 = pneg %p128
      $region14: #{tpu_custom_call.1} parent=5 // pred_check_branch
        %131 = sbr.rel (%p129) target = $region16
      $region15: #{tpu_custom_call.1} parent=5 // pred_region
        // Predicated region
        $region17: #{tpu_custom_call.1} parent=15 // pred_check
          %p132 = pneg %p51
        $region18: #{tpu_custom_call.1} parent=15 // pred_check_branch
          %134 = sbr.rel (%p132) target = $region20
        $region19: #{tpu_custom_call.1} parent=15 // pred_region
          %s135 = sand.u32 %s41, 1
          %s136 = scalar_lea.sflag [#allocation3], %s135
          %s137 = sand.u32 %s41, 1
          %s138 = smul.addr %s137, 8
          %s139 = scalar_lea.vmem [#allocation2], %s138
          %141 = vsyncadd %s136, 0
          %s142 = sadd.s32 %s25, %s24
          %s143 = smul.addr %s142, 8
          %s144 = scalar_lea.hbm %s0, %s143
          %s146 = sshll.u32 %s144, 4
          %s147 = int_to_ptr.hbm [resolvable:$true] %s146
          %s148 = sshll.u32 %s139, 4
          %s149 = int_to_ptr.vmem [resolvable:$true] %s148
          %151 = dma.hbm_to_vmem [thread:$0]  %s147, 128, %s149, %s136
        $region20: #{tpu_custom_call.1} parent=15 // pred_fallthru
          _
        // Predicated region
        $region21: #{tpu_custom_call.1} parent=15 // pred_check
          %p152 = pneg %p79
        $region22: #{tpu_custom_call.1} parent=15 // pred_check_branch
          %154 = sbr.rel (%p152) target = $region24
        $region23: #{tpu_custom_call.1} parent=15 // pred_region
          %s155 = sand.u32 %s69, 1
          %s156 = scalar_lea.sflag [#allocation6], %s155
          %s157 = sand.u32 %s69, 1
          %s158 = smul.addr %s157, 4
          %s159 = scalar_lea.vmem [#allocation5], %s158
          %161 = vsyncadd %s156, 0
          %s162 = sadd.s32 %s25, %s24
          %s163 = smul.addr %s162, 4
          %s164 = scalar_lea.hbm %s1, %s163
          %s166 = sshll.u32 %s164, 4
          %s167 = int_to_ptr.hbm [resolvable:$true] %s166
          %s168 = sshll.u32 %s159, 4
          %s169 = int_to_ptr.vmem [resolvable:$true] %s168
          %171 = dma.hbm_to_vmem [thread:$0]  %s167, 64, %s169, %s156
        $region24: #{tpu_custom_call.1} parent=15 // pred_fallthru
          _
      $region16: #{tpu_custom_call.1} parent=5 // pred_fallthru
        _
      %p172 = scmp.le.s32.totalorder 1, %s17
      %p173 = scmp.lt.s32.totalorder %s17, 3
      %p174 = pnand %p172, %p173
      %p175 = pneg %p174
      // Predicated region
      $region25: #{tpu_custom_call.1} parent=5 // pred_check
        _
      $region26: #{tpu_custom_call.1} parent=5 // pred_check_branch
        %177 = sbr.rel (%p174) target = $region28
      $region27: #{tpu_custom_call.1} parent=5 // pred_region
        %s178 = ssub.s32 %s17, 1
        %s179 = sand.u32 %s44, 1
        %s180 = scalar_lea.sflag [#allocation3], %s179
        %s181 = sand.u32 %s44, 1
        %s182 = smul.addr %s181, 8
        %s183 = scalar_lea.vmem [#allocation2], %s182
        // Predicated region
        $region29: #{tpu_custom_call.1} parent=27 // pred_check
          %p184 = pneg %p57
        $region30: #{tpu_custom_call.1} parent=27 // pred_check_branch
          %186 = sbr.rel (%p184) target = $region32
        $region31: #{tpu_custom_call.1} parent=27 // pred_region
          %188 = dma.done %s180, 128
        $region32: #{tpu_custom_call.1} parent=27 // pred_fallthru
          _
        %s189 = sand.u32 %s72, 1
        %s190 = scalar_lea.sflag [#allocation6], %s189
        %s191 = sand.u32 %s72, 1
        %s192 = smul.addr %s191, 4
        %s193 = scalar_lea.vmem [#allocation5], %s192
        // Predicated region
        $region33: #{tpu_custom_call.1} parent=27 // pred_check
          %p194 = pneg %p85
        $region34: #{tpu_custom_call.1} parent=27 // pred_check_branch
          %196 = sbr.rel (%p194) target = $region36
        $region35: #{tpu_custom_call.1} parent=27 // pred_region
          %198 = dma.done %s190, 64
        $region36: #{tpu_custom_call.1} parent=27 // pred_fallthru
          _
        %s199 = sand.u32 %s44, 1
        %s200 = scalar_lea.sflag [#allocation3], %s199
        %s201 = sand.u32 %s44, 1
        %s202 = smul.addr %s201, 8
        %s203 = scalar_lea.vmem [#allocation2], %s202
        %p204 = pneg %p57
        %p205 = pneg %p54
        %s206 = sand.u32 %s72, 1
        %s207 = scalar_lea.sflag [#allocation6], %s206
        %s208 = sand.u32 %s72, 1
        %s209 = smul.addr %s208, 4
        %s210 = scalar_lea.vmem [#allocation5], %s209
        %p211 = pneg %p85
        %p212 = pneg %p82
        %p213 = pneg %p113
        %p214 = pneg %p110
        %s215 = sand.u32 %s100, 1
        %s216 = scalar_lea.sflag [#allocation4], %s215
        %s217 = sand.u32 %s100, 1
        %s218 = smul.addr %s217, 128
        %s219 = scalar_lea.smem [#allocation7], %s218
        %v220 = vld [vmem:[%s183] sm:$0xff]
        %v221 = vld [vmem:[%s193] sm:$0xf]
        %v222 = vunpack.c.l.bf16 %v221
        %v223 = vmul.f32 %v220, 0.5
        %v224 = vtanh.pop %v223
        %v225 = vadd.f32 %v224, 1.0
        %v226 = vmul.f32 %v225, 0.5
        %v227 = vmul.f32 %v226, %v222
        %v228 = vadd.f32 %v227, 0.0
        %229 = vadd.xlane.f32.xlu0 %v228
        %v230 = vpop.xlane.xlu0 %229
        %v231 = vrot.slane %v230, 4
        %v232 = vadd.f32 %v230, %v231
        %v233 = vrot.slane %v232, 2
        %v234 = vadd.f32 %v232, %v233
        %v235 = vrot.slane %v234, 1
        %v236 = vadd.f32 %v234, %v235
        %s237 = vtos %v236
        %s238 = scalar_lea.smem %s219, 0 [#allocation7]
        %239 = sst [smem:[%s238]] %s237
        %v240 = vadd.f32 %v226, 0.0
        %241 = vadd.xlane.f32.xlu0 %v240
        %v242 = vpop.xlane.xlu0 %241
        %v243 = vrot.slane %v242, 4
        %v244 = vadd.f32 %v242, %v243
        %v245 = vrot.slane %v244, 2
        %v246 = vadd.f32 %v244, %v245
        %v247 = vrot.slane %v246, 1
        %v248 = vadd.f32 %v246, %v247
        %s249 = vtos %v248
        %s250 = scalar_lea.smem %s219, 1 [#allocation7]
        %251 = sst [smem:[%s250]] %s249
        %v252 = vadd.f32 %v222, 0.0
        %253 = vadd.xlane.f32.xlu0 %v252
        %v254 = vpop.xlane.xlu0 %253
        %v255 = vrot.slane %v254, 4
        %v256 = vadd.f32 %v254, %v255
        %v257 = vrot.slane %v256, 2
        %v258 = vadd.f32 %v256, %v257
        %v259 = vrot.slane %v258, 1
        %v260 = vadd.f32 %v258, %v259
        %s261 = vtos %v260
        %s262 = scalar_lea.smem %s219, 2 [#allocation7]
        %263 = sst [smem:[%s262]] %s261
        %s264 = sand.u32 %s100, 1
        %s265 = scalar_lea.sflag [#allocation4], %s264
        %s266 = sand.u32 %s100, 1
        %s267 = smul.addr %s266, 128
        %s268 = scalar_lea.smem [#allocation7], %s267
        // Predicated region
        $region37: #{tpu_custom_call.1} parent=27 // pred_check
          %p269 = pneg %p110
        $region38: #{tpu_custom_call.1} parent=27 // pred_check_branch
          %271 = sbr.rel (%p269) target = $region40
        $region39: #{tpu_custom_call.1} parent=27 // pred_region
          %273 = vsyncadd %s265, 0
          %s274 = sadd.s32 %s27, %s26
          %s275 = scalar_lea.hbm %s2, %s274
          %s277 = sshll.u32 %s275, 4
          %s278 = int_to_ptr.hbm [resolvable:$true] %s277
          %280 = dma.smem_to_hbm %s268, 16, %s278, %s265
        $region40: #{tpu_custom_call.1} parent=27 // pred_fallthru
          _
      $region28: #{tpu_custom_call.1} parent=5 // pred_fallthru
        _
      %p281 = scmp.le.s32.totalorder 2, %s17
      // Predicated region
      $region41: #{tpu_custom_call.1} parent=5 // pred_check
        %p282 = pneg %p281
      $region42: #{tpu_custom_call.1} parent=5 // pred_check_branch
        %284 = sbr.rel (%p282) target = $region44
      $region43: #{tpu_custom_call.1} parent=5 // pred_region
        %s285 = ssub.s32 %s17, 2
        // Predicated region
        $region45: #{tpu_custom_call.1} parent=43 // pred_check
          %p286 = pneg %p116
        $region46: #{tpu_custom_call.1} parent=43 // pred_check_branch
          %288 = sbr.rel (%p286) target = $region48
        $region47: #{tpu_custom_call.1} parent=43 // pred_region
          %s289 = sand.u32 %s101, 1
          %s290 = scalar_lea.sflag [#allocation4], %s289
          %s291 = sand.u32 %s101, 1
          %s292 = smul.addr %s291, 128
          %s293 = scalar_lea.smem [#allocation7], %s292
          %295 = dma.done %s290, 16
        $region48: #{tpu_custom_call.1} parent=43 // pred_fallthru
          _
        %296 = sfence
      $region44: #{tpu_custom_call.1} parent=5 // pred_fallthru
        _
    $region6: #{tpu_custom_call.1} parent=1 // loop_footer
      %s21 = sadd.s32 1, %s17
    $region7: #{tpu_custom_call.1} parent=1 // loop_footer_branch
      %16 = sbr.rel target = $region3
    $region8: #{tpu_custom_call.1} parent=1 // loop_exit
      _
    %297 = vsyncpa [#allocation3], 1
    %s298 = scalar_lea.sflag [#allocation3], 1
    %299 = vsyncpa %s298, 1
    %300 = vsyncpa [#allocation6], 1
    %s301 = scalar_lea.sflag [#allocation6], 1
    %302 = vsyncpa %s301, 1
    %303 = vsyncpa [#allocation4], 1
    %s304 = scalar_lea.sflag [#allocation4], 1
    %305 = vsyncpa %s304, 1

</llo_original>
